<compile_context>
chip_gen: v5e
topology: v5e:2x2
jax: 0.10.0
libtpu: 0.0.40
codegen_flags: <defaults>
</compile_context>

<pallas_src>
import jax
import jax.numpy as jnp
from jax.experimental import pallas as pl
from jax.experimental.pallas import tpu as pltpu

LANES = 128


def pack_params(params, raw_input_size):
    """Split W1 into (W1x, W1h) and pack all params into one (rows, 128) f32 slab.

    Each parameter is zero-padded to (round_up(rows, 8), 128) and stacked
    row-wise.  Returns (slab, layout) where layout is a list of
    (row_offset, rows, cols) in kernel unpack order:
        w1x, w1h, b1, [w_i, b_i for hidden layers 2..], wo, bo
    """
    (w1, b1) = params[0]
    w1x, w1h = w1[:raw_input_size, :], w1[raw_input_size:, :]
    mats = [w1x, w1h, b1]
    for (w, b) in params[1:-1]:
        mats.extend([w, b])
    wo, bo = params[-1]
    mats.extend([wo, bo])

    layout = []
    blocks = []
    off = 0
    for m in mats:
        r, c = m.shape
        pr = ((r + 7) // 8) * 8
        blk = jnp.zeros((pr, LANES), jnp.float32).at[:r, :c].set(m)
        blocks.append(blk)
        layout.append((off, r, c))
        off += pr
    slab = jnp.concatenate(blocks, axis=0)
    return slab, layout


def make_rnn_kernel(layout, n_hidden, use_delta, seq_len):
    """Build a Pallas kernel specialized to the (static) layer layout,
    sequence length and whether the _data_delta path is used."""
    assert n_hidden >= 1
    w1x_l, w1h_l, b1_l = layout[0], layout[1], layout[2]
    hid_l = layout[3:3 + 2 * (n_hidden - 1)]
    wo_l, bo_l = layout[-2], layout[-1]

    def read(slab_ref, l):
        off, r, c = l
        return slab_ref[off:off + r, 0:c]  # static slice of the resident slab

    def kernel(*refs):
        i = 0
        x_ref = refs[i]; i += 1
        if use_delta:
            delta_ref = refs[i]; i += 1
        slab_ref = refs[i]; i += 1
        out_ref = refs[i]

        O = out_ref.shape[1]

        # ---- Hoist all parameter loads out of the recurrent loop ----------
        w1x = read(slab_ref, w1x_l)
        w1h = read(slab_ref, w1h_l)
        b1 = read(slab_ref, b1_l)
        hidden = [(read(slab_ref, hid_l[2 * li]), read(slab_ref, hid_l[2 * li + 1]))
                  for li in range(n_hidden - 1)]
        wo = read(slab_ref, wo_l)
        bo = read(slab_ref, bo_l)

        # ---- Precompute the input projection for ALL timesteps at once ----
        x = x_ref[...]                                      # (T, R)
        if use_delta:                                       # ignore_data_err=False
            x = x + delta_ref[...]
        xp = jnp.dot(x, w1x, preferred_element_type=jnp.float32) + b1   # (T, H1)

        # ---- Recurrence: fully unrolled (T is static and small) -----------
        h = jnp.zeros((1, O), jnp.float32)
        for t in range(seq_len):
            # Layer 1: Linear(R + O -> H1) on concat(x, h), then Tanh.
            z = jnp.tanh(
                xp[t:t + 1, :]
                + jnp.dot(h, w1h, preferred_element_type=jnp.float32))
            # Remaining hidden layers: Linear + Tanh.
            for (w, b) in hidden:
                z = jnp.tanh(
                    jnp.dot(z, w, preferred_element_type=jnp.float32) + b)
            # Output Linear + Sigmoid -> new recurrent state.
            y = jnp.dot(z, wo, preferred_element_type=jnp.float32) + bo
            # sigmoid(y) == 0.5*tanh(y/2)+0.5 : one EUP op on the serial path
            # instead of exp + divide.
            h = 0.5 * jnp.tanh(0.5 * y) + 0.5
        out_ref[...] = h

    return kernel


def init_params(key, raw_input_size, hidden_sizes, output_size):
    """Deterministic init mirroring torch.nn.Linear default (uniform +/- 1/sqrt(fan_in))."""
    params = []
    last_size = raw_input_size + output_size
    sizes = list(hidden_sizes) + [output_size]
    for hsize in sizes:
        key, kw, kb = jax.random.split(key, 3)
        bound = 1.0 / jnp.sqrt(last_size)
        w = jax.random.uniform(kw, (last_size, hsize), jnp.float32, -bound, bound)
        b = jax.random.uniform(kb, (1, hsize), jnp.float32, -bound, bound)
        params.append((w, b))
        last_size = hsize
    return params


def rnn_forward(x, delta, params, raw_input_size, ignore_data_err=True):
    """Pallas-backed equivalent of RNN.forward(input_gen, ignore_data_err)."""
    n_hidden = len(params) - 1
    slab, layout = pack_params(params, raw_input_size)
    O = params[-1][1].shape[1]
    H1 = params[0][0].shape[1]
    T = x.shape[0]
    use_delta = not ignore_data_err

    kernel = make_rnn_kernel(layout, n_hidden, use_delta=use_delta, seq_len=T)

    def full_spec(a):
        nd = a.ndim
        return pl.BlockSpec(a.shape, lambda i, _nd=nd: (0,) * _nd)

    # Only DMA delta in when it is actually used (no useless DMA / VMEM buffer).
    inputs = [x] + ([delta] if use_delta else []) + [slab]

    # Advisory cost hint so XLA does not mis-schedule around a tiny custom call.
    flops = 2 * T * raw_input_size * H1                       # xp precompute
    per_step = 2 * O * H1                                     # h @ W1h
    for (w, _b) in params[1:]:
        per_step += 2 * w.shape[0] * w.shape[1]
    flops += T * per_step
    transcendentals = T * (sum(p[1].shape[1] for p in params[:-1]) + O)
    bytes_accessed = 4 * (x.size + (delta.size if use_delta else 0) + slab.size + O)

    out = pl.pallas_call(
        kernel,
        out_shape=jax.ShapeDtypeStruct((1, O), jnp.float32),
        grid=(1,),
        in_specs=[full_spec(a) for a in inputs],
        out_specs=pl.BlockSpec((1, O), lambda i: (0, 0)),
        cost_estimate=pl.CostEstimate(flops=int(flops),
                                      transcendentals=int(transcendentals),
                                      bytes_accessed=int(bytes_accessed)),
        compiler_params=pltpu.CompilerParams(
            dimension_semantics=("arbitrary",)),
    )(*inputs)
    return out[0]  # shape (output_size,), matching the PyTorch module


def rnn_reference(x, delta, params, raw_input_size, ignore_data_err=True):
    """Pure-JAX reference of the PyTorch forward loop."""
    O = params[-1][1].shape[1]
    h = jnp.zeros((O,), jnp.float32)
    T = x.shape[0]
    for t in range(T):
        inp = x[t]
        if not ignore_data_err:
            inp = inp + delta[t]
        v = jnp.concatenate([inp, h])
        for (w, b) in params[:-1]:
            v = jnp.tanh(v @ w + b[0])
        wo, bo = params[-1]
        h = jax.nn.sigmoid(v @ wo + bo[0])
    return h


if __name__ == "__main__":
    raw_input_size = 16
    hidden_sizes = (32, 32)
    output_size = 16
    seq_len = 8  # gen_length

    key = jax.random.PRNGKey(0)
    key, kx, kd = jax.random.split(key, 3)

    # The generator of chunks, stacked time-major.
    x = jax.random.normal(kx, (seq_len, raw_input_size), jnp.float32)
    # _data_delta parameter (zeros in __init__; random here to exercise the path).
    delta = 0.1 * jax.random.normal(kd, (seq_len, raw_input_size), jnp.float32)

    params = init_params(key, raw_input_size, hidden_sizes, output_size)

    # Default path: ignore_data_err=True (delta never enters the kernel).
    out = rnn_forward(x, None, params, raw_input_size, ignore_data_err=True)
    out = jax.block_until_ready(out)
    ref = rnn_reference(x, None, params, raw_input_size, ignore_data_err=True)
    assert out.shape == (output_size,)
    assert jnp.allclose(out, ref, atol=1e-5, rtol=1e-5), (out, ref)

    # Delta path: ignore_data_err=False (x + delta folded into the hoisted projection).
    out_d = rnn_forward(x, delta, params, raw_input_size, ignore_data_err=False)
    out_d = jax.block_until_ready(out_d)
    ref_d = rnn_reference(x, delta, params, raw_input_size, ignore_data_err=False)
    assert jnp.allclose(out_d, ref_d, atol=1e-5, rtol=1e-5), (out_d, ref_d)

    print("KERNEL_OK")
</pallas_src>

<mosaic_0001>
module attributes {stable_mosaic.version = 11 : i64} {
  func.func @kernel(%arg0: i32, %arg1: memref<8x16xf32, #tpu.memory_space<vmem>>, %arg2: memref<120x128xf32, #tpu.memory_space<vmem>>, %arg3: memref<1x16xf32, #tpu.memory_space<vmem>>) attributes {dimension_semantics = [#tpu.dimension_semantics<arbitrary>], iteration_bounds = array<i64: 1>, scalar_prefetch = 0 : i64, scratch_operands = 0 : i64, tpu.core_type = #tpu.core_type<tc>, window_params = [{pipeline_mode = #tpu.pipeline_mode<synchronous>, transform_indices = @transform_0, window_bounds = array<i64: 8, 16>}, {pipeline_mode = #tpu.pipeline_mode<synchronous>, transform_indices = @transform_1, window_bounds = array<i64: 120, 128>}, {pipeline_mode = #tpu.pipeline_mode<synchronous>, transform_indices = @transform_2, window_bounds = array<i64: 1, 16>}]} {
    %c0 = arith.constant 0 : index
    %c0_0 = arith.constant 0 : index
    %0 = vector.load %arg2[%c0, %c0_0] : memref<120x128xf32, #tpu.memory_space<vmem>>, vector<16x32xf32>
    %c16 = arith.constant 16 : index
    %c0_1 = arith.constant 0 : index
    %1 = vector.load %arg2[%c16, %c0_1] : memref<120x128xf32, #tpu.memory_space<vmem>>, vector<16x32xf32>
    %c32 = arith.constant 32 : index
    %c0_2 = arith.constant 0 : index
    %2 = vector.load %arg2[%c32, %c0_2] : memref<120x128xf32, #tpu.memory_space<vmem>>, vector<1x32xf32>
    %c40 = arith.constant 40 : index
    %c0_3 = arith.constant 0 : index
    %3 = vector.load %arg2[%c40, %c0_3] : memref<120x128xf32, #tpu.memory_space<vmem>>, vector<32x32xf32>
    %c72 = arith.constant 72 : index
    %c0_4 = arith.constant 0 : index
    %4 = vector.load %arg2[%c72, %c0_4] : memref<120x128xf32, #tpu.memory_space<vmem>>, vector<1x32xf32>
    %c80 = arith.constant 80 : index
    %c0_5 = arith.constant 0 : index
    %5 = vector.load %arg2[%c80, %c0_5] : memref<120x128xf32, #tpu.memory_space<vmem>>, vector<32x16xf32>
    %c112 = arith.constant 112 : index
    %c0_6 = arith.constant 0 : index
    %6 = vector.load %arg2[%c112, %c0_6] : memref<120x128xf32, #tpu.memory_space<vmem>>, vector<1x16xf32>
    %c0_7 = arith.constant 0 : index
    %c0_8 = arith.constant 0 : index
    %7 = vector.load %arg1[%c0_7, %c0_8] : memref<8x16xf32, #tpu.memory_space<vmem>>, vector<8x16xf32>
    %cst = arith.constant dense<0.000000e+00> : vector<8x32xf32>
    %8 = tpu.matmul %7, %0, %cst {dimension_numbers = #tpu.dot_dimension_numbers<[1], [0], [0], [1], [0, 0, 1, 1], [], []>} : vector<8x16xf32>, vector<16x32xf32>, vector<8x32xf32> -> vector<8x32xf32>
    %9 = vector.broadcast %2 : vector<1x32xf32> to vector<8x32xf32>
    %10 = arith.addf %8, %9 : vector<8x32xf32>
    %cst_9 = arith.constant 0.000000e+00 : f32
    %11 = vector.broadcast %cst_9 : f32 to vector<1x16xf32>
    %12 = vector.extract_strided_slice %10 {offsets = [0, 0], sizes = [1, 32], strides = [1, 1]} : vector<8x32xf32> to vector<1x32xf32>
    %cst_10 = arith.constant dense<0.000000e+00> : vector<1x32xf32>
    %13 = tpu.matmul %11, %1, %cst_10 {dimension_numbers = #tpu.dot_dimension_numbers<[1], [0], [0], [1], [0, 0, 1, 1], [], []>} : vector<1x16xf32>, vector<16x32xf32>, vector<1x32xf32> -> vector<1x32xf32>
    %14 = arith.addf %12, %13 : vector<1x32xf32>
    %15 = math.tanh %14 : vector<1x32xf32>
    %cst_11 = arith.constant dense<0.000000e+00> : vector<1x32xf32>
    %16 = tpu.matmul %15, %3, %cst_11 {dimension_numbers = #tpu.dot_dimension_numbers<[1], [0], [0], [1], [0, 0, 1, 1], [], []>} : vector<1x32xf32>, vector<32x32xf32>, vector<1x32xf32> -> vector<1x32xf32>
    %17 = arith.addf %16, %4 : vector<1x32xf32>
    %18 = math.tanh %17 : vector<1x32xf32>
    %cst_12 = arith.constant dense<0.000000e+00> : vector<1x16xf32>
    %19 = tpu.matmul %18, %5, %cst_12 {dimension_numbers = #tpu.dot_dimension_numbers<[1], [0], [0], [1], [0, 0, 1, 1], [], []>} : vector<1x32xf32>, vector<32x16xf32>, vector<1x16xf32> -> vector<1x16xf32>
    %20 = arith.addf %19, %6 : vector<1x16xf32>
    %cst_13 = arith.constant 5.000000e-01 : f32
    %21 = vector.broadcast %cst_13 : f32 to vector<1x16xf32>
    %22 = arith.mulf %21, %20 : vector<1x16xf32>
    %23 = math.tanh %22 : vector<1x16xf32>
    %cst_14 = arith.constant 5.000000e-01 : f32
    %24 = vector.broadcast %cst_14 : f32 to vector<1x16xf32>
    %25 = arith.mulf %24, %23 : vector<1x16xf32>
    %cst_15 = arith.constant 5.000000e-01 : f32
    %26 = vector.broadcast %cst_15 : f32 to vector<1x16xf32>
    %27 = arith.addf %25, %26 : vector<1x16xf32>
    %28 = vector.extract_strided_slice %10 {offsets = [1, 0], sizes = [1, 32], strides = [1, 1]} : vector<8x32xf32> to vector<1x32xf32>
    %cst_16 = arith.constant dense<0.000000e+00> : vector<1x32xf32>
    %29 = tpu.matmul %27, %1, %cst_16 {dimension_numbers = #tpu.dot_dimension_numbers<[1], [0], [0], [1], [0, 0, 1, 1], [], []>} : vector<1x16xf32>, vector<16x32xf32>, vector<1x32xf32> -> vector<1x32xf32>
    %30 = arith.addf %28, %29 : vector<1x32xf32>
    %31 = math.tanh %30 : vector<1x32xf32>
    %cst_17 = arith.constant dense<0.000000e+00> : vector<1x32xf32>
    %32 = tpu.matmul %31, %3, %cst_17 {dimension_numbers = #tpu.dot_dimension_numbers<[1], [0], [0], [1], [0, 0, 1, 1], [], []>} : vector<1x32xf32>, vector<32x32xf32>, vector<1x32xf32> -> vector<1x32xf32>
    %33 = arith.addf %32, %4 : vector<1x32xf32>
    %34 = math.tanh %33 : vector<1x32xf32>
    %cst_18 = arith.constant dense<0.000000e+00> : vector<1x16xf32>
    %35 = tpu.matmul %34, %5, %cst_18 {dimension_numbers = #tpu.dot_dimension_numbers<[1], [0], [0], [1], [0, 0, 1, 1], [], []>} : vector<1x32xf32>, vector<32x16xf32>, vector<1x16xf32> -> vector<1x16xf32>
    %36 = arith.addf %35, %6 : vector<1x16xf32>
    %cst_19 = arith.constant 5.000000e-01 : f32
    %37 = vector.broadcast %cst_19 : f32 to vector<1x16xf32>
    %38 = arith.mulf %37, %36 : vector<1x16xf32>
    %39 = math.tanh %38 : vector<1x16xf32>
    %cst_20 = arith.constant 5.000000e-01 : f32
    %40 = vector.broadcast %cst_20 : f32 to vector<1x16xf32>
    %41 = arith.mulf %40, %39 : vector<1x16xf32>
    %cst_21 = arith.constant 5.000000e-01 : f32
    %42 = vector.broadcast %cst_21 : f32 to vector<1x16xf32>
    %43 = arith.addf %41, %42 : vector<1x16xf32>
    %44 = vector.extract_strided_slice %10 {offsets = [2, 0], sizes = [1, 32], strides = [1, 1]} : vector<8x32xf32> to vector<1x32xf32>
    %cst_22 = arith.constant dense<0.000000e+00> : vector<1x32xf32>
    %45 = tpu.matmul %43, %1, %cst_22 {dimension_numbers = #tpu.dot_dimension_numbers<[1], [0], [0], [1], [0, 0, 1, 1], [], []>} : vector<1x16xf32>, vector<16x32xf32>, vector<1x32xf32> -> vector<1x32xf32>
    %46 = arith.addf %44, %45 : vector<1x32xf32>
    %47 = math.tanh %46 : vector<1x32xf32>
    %cst_23 = arith.constant dense<0.000000e+00> : vector<1x32xf32>
    %48 = tpu.matmul %47, %3, %cst_23 {dimension_numbers = #tpu.dot_dimension_numbers<[1], [0], [0], [1], [0, 0, 1, 1], [], []>} : vector<1x32xf32>, vector<32x32xf32>, vector<1x32xf32> -> vector<1x32xf32>
    %49 = arith.addf %48, %4 : vector<1x32xf32>
    %50 = math.tanh %49 : vector<1x32xf32>
    %cst_24 = arith.constant dense<0.000000e+00> : vector<1x16xf32>
    %51 = tpu.matmul %50, %5, %cst_24 {dimension_numbers = #tpu.dot_dimension_numbers<[1], [0], [0], [1], [0, 0, 1, 1], [], []>} : vector<1x32xf32>, vector<32x16xf32>, vector<1x16xf32> -> vector<1x16xf32>
    %52 = arith.addf %51, %6 : vector<1x16xf32>
    %cst_25 = arith.constant 5.000000e-01 : f32
    %53 = vector.broadcast %cst_25 : f32 to vector<1x16xf32>
    %54 = arith.mulf %53, %52 : vector<1x16xf32>
    %55 = math.tanh %54 : vector<1x16xf32>
    %cst_26 = arith.constant 5.000000e-01 : f32
    %56 = vector.broadcast %cst_26 : f32 to vector<1x16xf32>
    %57 = arith.mulf %56, %55 : vector<1x16xf32>
    %cst_27 = arith.constant 5.000000e-01 : f32
    %58 = vector.broadcast %cst_27 : f32 to vector<1x16xf32>
    %59 = arith.addf %57, %58 : vector<1x16xf32>
    %60 = vector.extract_strided_slice %10 {offsets = [3, 0], sizes = [1, 32], strides = [1, 1]} : vector<8x32xf32> to vector<1x32xf32>
    %cst_28 = arith.constant dense<0.000000e+00> : vector<1x32xf32>
    %61 = tpu.matmul %59, %1, %cst_28 {dimension_numbers = #tpu.dot_dimension_numbers<[1], [0], [0], [1], [0, 0, 1, 1], [], []>} : vector<1x16xf32>, vector<16x32xf32>, vector<1x32xf32> -> vector<1x32xf32>
    %62 = arith.addf %60, %61 : vector<1x32xf32>
    %63 = math.tanh %62 : vector<1x32xf32>
    %cst_29 = arith.constant dense<0.000000e+00> : vector<1x32xf32>
    %64 = tpu.matmul %63, %3, %cst_29 {dimension_numbers = #tpu.dot_dimension_numbers<[1], [0], [0], [1], [0, 0, 1, 1], [], []>} : vector<1x32xf32>, vector<32x32xf32>, vector<1x32xf32> -> vector<1x32xf32>
    %65 = arith.addf %64, %4 : vector<1x32xf32>
    %66 = math.tanh %65 : vector<1x32xf32>
    %cst_30 = arith.constant dense<0.000000e+00> : vector<1x16xf32>
    %67 = tpu.matmul %66, %5, %cst_30 {dimension_numbers = #tpu.dot_dimension_numbers<[1], [0], [0], [1], [0, 0, 1, 1], [], []>} : vector<1x32xf32>, vector<32x16xf32>, vector<1x16xf32> -> vector<1x16xf32>
    %68 = arith.addf %67, %6 : vector<1x16xf32>
    %cst_31 = arith.constant 5.000000e-01 : f32
    %69 = vector.broadcast %cst_31 : f32 to vector<1x16xf32>
    %70 = arith.mulf %69, %68 : vector<1x16xf32>
    %71 = math.tanh %70 : vector<1x16xf32>
    %cst_32 = arith.constant 5.000000e-01 : f32
    %72 = vector.broadcast %cst_32 : f32 to vector<1x16xf32>
    %73 = arith.mulf %72, %71 : vector<1x16xf32>
    %cst_33 = arith.constant 5.000000e-01 : f32
    %74 = vector.broadcast %cst_33 : f32 to vector<1x16xf32>
    %75 = arith.addf %73, %74 : vector<1x16xf32>
    %76 = vector.extract_strided_slice %10 {offsets = [4, 0], sizes = [1, 32], strides = [1, 1]} : vector<8x32xf32> to vector<1x32xf32>
    %cst_34 = arith.constant dense<0.000000e+00> : vector<1x32xf32>
    %77 = tpu.matmul %75, %1, %cst_34 {dimension_numbers = #tpu.dot_dimension_numbers<[1], [0], [0], [1], [0, 0, 1, 1], [], []>} : vector<1x16xf32>, vector<16x32xf32>, vector<1x32xf32> -> vector<1x32xf32>
    %78 = arith.addf %76, %77 : vector<1x32xf32>
    %79 = math.tanh %78 : vector<1x32xf32>
    %cst_35 = arith.constant dense<0.000000e+00> : vector<1x32xf32>
    %80 = tpu.matmul %79, %3, %cst_35 {dimension_numbers = #tpu.dot_dimension_numbers<[1], [0], [0], [1], [0, 0, 1, 1], [], []>} : vector<1x32xf32>, vector<32x32xf32>, vector<1x32xf32> -> vector<1x32xf32>
    %81 = arith.addf %80, %4 : vector<1x32xf32>
    %82 = math.tanh %81 : vector<1x32xf32>
    %cst_36 = arith.constant dense<0.000000e+00> : vector<1x16xf32>
    %83 = tpu.matmul %82, %5, %cst_36 {dimension_numbers = #tpu.dot_dimension_numbers<[1], [0], [0], [1], [0, 0, 1, 1], [], []>} : vector<1x32xf32>, vector<32x16xf32>, vector<1x16xf32> -> vector<1x16xf32>
    %84 = arith.addf %83, %6 : vector<1x16xf32>
    %cst_37 = arith.constant 5.000000e-01 : f32
    %85 = vector.broadcast %cst_37 : f32 to vector<1x16xf32>
    %86 = arith.mulf %85, %84 : vector<1x16xf32>
    %87 = math.tanh %86 : vector<1x16xf32>
    %cst_38 = arith.constant 5.000000e-01 : f32
    %88 = vector.broadcast %cst_38 : f32 to vector<1x16xf32>
    %89 = arith.mulf %88, %87 : vector<1x16xf32>
    %cst_39 = arith.constant 5.000000e-01 : f32
    %90 = vector.broadcast %cst_39 : f32 to vector<1x16xf32>
    %91 = arith.addf %89, %90 : vector<1x16xf32>
    %92 = vector.extract_strided_slice %10 {offsets = [5, 0], sizes = [1, 32], strides = [1, 1]} : vector<8x32xf32> to vector<1x32xf32>
    %cst_40 = arith.constant dense<0.000000e+00> : vector<1x32xf32>
    %93 = tpu.matmul %91, %1, %cst_40 {dimension_numbers = #tpu.dot_dimension_numbers<[1], [0], [0], [1], [0, 0, 1, 1], [], []>} : vector<1x16xf32>, vector<16x32xf32>, vector<1x32xf32> -> vector<1x32xf32>
    %94 = arith.addf %92, %93 : vector<1x32xf32>
    %95 = math.tanh %94 : vector<1x32xf32>
    %cst_41 = arith.constant dense<0.000000e+00> : vector<1x32xf32>
    %96 = tpu.matmul %95, %3, %cst_41 {dimension_numbers = #tpu.dot_dimension_numbers<[1], [0], [0], [1], [0, 0, 1, 1], [], []>} : vector<1x32xf32>, vector<32x32xf32>, vector<1x32xf32> -> vector<1x32xf32>
    %97 = arith.addf %96, %4 : vector<1x32xf32>
    %98 = math.tanh %97 : vector<1x32xf32>
    %cst_42 = arith.constant dense<0.000000e+00> : vector<1x16xf32>
    %99 = tpu.matmul %98, %5, %cst_42 {dimension_numbers = #tpu.dot_dimension_numbers<[1], [0], [0], [1], [0, 0, 1, 1], [], []>} : vector<1x32xf32>, vector<32x16xf32>, vector<1x16xf32> -> vector<1x16xf32>
    %100 = arith.addf %99, %6 : vector<1x16xf32>
    %cst_43 = arith.constant 5.000000e-01 : f32
    %101 = vector.broadcast %cst_43 : f32 to vector<1x16xf32>
    %102 = arith.mulf %101, %100 : vector<1x16xf32>
    %103 = math.tanh %102 : vector<1x16xf32>
    %cst_44 = arith.constant 5.000000e-01 : f32
    %104 = vector.broadcast %cst_44 : f32 to vector<1x16xf32>
    %105 = arith.mulf %104, %103 : vector<1x16xf32>
    %cst_45 = arith.constant 5.000000e-01 : f32
    %106 = vector.broadcast %cst_45 : f32 to vector<1x16xf32>
    %107 = arith.addf %105, %106 : vector<1x16xf32>
    %108 = vector.extract_strided_slice %10 {offsets = [6, 0], sizes = [1, 32], strides = [1, 1]} : vector<8x32xf32> to vector<1x32xf32>
    %cst_46 = arith.constant dense<0.000000e+00> : vector<1x32xf32>
    %109 = tpu.matmul %107, %1, %cst_46 {dimension_numbers = #tpu.dot_dimension_numbers<[1], [0], [0], [1], [0, 0, 1, 1], [], []>} : vector<1x16xf32>, vector<16x32xf32>, vector<1x32xf32> -> vector<1x32xf32>
    %110 = arith.addf %108, %109 : vector<1x32xf32>
    %111 = math.tanh %110 : vector<1x32xf32>
    %cst_47 = arith.constant dense<0.000000e+00> : vector<1x32xf32>
    %112 = tpu.matmul %111, %3, %cst_47 {dimension_numbers = #tpu.dot_dimension_numbers<[1], [0], [0], [1], [0, 0, 1, 1], [], []>} : vector<1x32xf32>, vector<32x32xf32>, vector<1x32xf32> -> vector<1x32xf32>
    %113 = arith.addf %112, %4 : vector<1x32xf32>
    %114 = math.tanh %113 : vector<1x32xf32>
    %cst_48 = arith.constant dense<0.000000e+00> : vector<1x16xf32>
    %115 = tpu.matmul %114, %5, %cst_48 {dimension_numbers = #tpu.dot_dimension_numbers<[1], [0], [0], [1], [0, 0, 1, 1], [], []>} : vector<1x32xf32>, vector<32x16xf32>, vector<1x16xf32> -> vector<1x16xf32>
    %116 = arith.addf %115, %6 : vector<1x16xf32>
    %cst_49 = arith.constant 5.000000e-01 : f32
    %117 = vector.broadcast %cst_49 : f32 to vector<1x16xf32>
    %118 = arith.mulf %117, %116 : vector<1x16xf32>
    %119 = math.tanh %118 : vector<1x16xf32>
    %cst_50 = arith.constant 5.000000e-01 : f32
    %120 = vector.broadcast %cst_50 : f32 to vector<1x16xf32>
    %121 = arith.mulf %120, %119 : vector<1x16xf32>
    %cst_51 = arith.constant 5.000000e-01 : f32
    %122 = vector.broadcast %cst_51 : f32 to vector<1x16xf32>
    %123 = arith.addf %121, %122 : vector<1x16xf32>
    %124 = vector.extract_strided_slice %10 {offsets = [7, 0], sizes = [1, 32], strides = [1, 1]} : vector<8x32xf32> to vector<1x32xf32>
    %cst_52 = arith.constant dense<0.000000e+00> : vector<1x32xf32>
    %125 = tpu.matmul %123, %1, %cst_52 {dimension_numbers = #tpu.dot_dimension_numbers<[1], [0], [0], [1], [0, 0, 1, 1], [], []>} : vector<1x16xf32>, vector<16x32xf32>, vector<1x32xf32> -> vector<1x32xf32>
    %126 = arith.addf %124, %125 : vector<1x32xf32>
    %127 = math.tanh %126 : vector<1x32xf32>
    %cst_53 = arith.constant dense<0.000000e+00> : vector<1x32xf32>
    %128 = tpu.matmul %127, %3, %cst_53 {dimension_numbers = #tpu.dot_dimension_numbers<[1], [0], [0], [1], [0, 0, 1, 1], [], []>} : vector<1x32xf32>, vector<32x32xf32>, vector<1x32xf32> -> vector<1x32xf32>
    %129 = arith.addf %128, %4 : vector<1x32xf32>
    %130 = math.tanh %129 : vector<1x32xf32>
    %cst_54 = arith.constant dense<0.000000e+00> : vector<1x16xf32>
    %131 = tpu.matmul %130, %5, %cst_54 {dimension_numbers = #tpu.dot_dimension_numbers<[1], [0], [0], [1], [0, 0, 1, 1], [], []>} : vector<1x32xf32>, vector<32x16xf32>, vector<1x16xf32> -> vector<1x16xf32>
    %132 = arith.addf %131, %6 : vector<1x16xf32>
    %cst_55 = arith.constant 5.000000e-01 : f32
    %133 = vector.broadcast %cst_55 : f32 to vector<1x16xf32>
    %134 = arith.mulf %133, %132 : vector<1x16xf32>
    %135 = math.tanh %134 : vector<1x16xf32>
    %cst_56 = arith.constant 5.000000e-01 : f32
    %136 = vector.broadcast %cst_56 : f32 to vector<1x16xf32>
    %137 = arith.mulf %136, %135 : vector<1x16xf32>
    %cst_57 = arith.constant 5.000000e-01 : f32
    %138 = vector.broadcast %cst_57 : f32 to vector<1x16xf32>
    %139 = arith.addf %137, %138 : vector<1x16xf32>
    %c0_58 = arith.constant 0 : index
    %c0_59 = arith.constant 0 : index
    %140 = vector.load %arg3[%c0_58, %c0_59] : memref<1x16xf32, #tpu.memory_space<vmem>>, vector<1x16xf32>
    tpu.vector_store %arg3[%c0_58, %c0_59], %139 {strides = array<i32>} : memref<1x16xf32, #tpu.memory_space<vmem>>, vector<1x16xf32>,
    return
  }
  func.func @transform_0(%arg0: i32) -> (i32, i32) {
    %c0_i32 = arith.constant 0 : i32
    %c0_i32_0 = arith.constant 0 : i32
    %c0_i32_1 = arith.constant 0 : i32
    return %c0_i32, %c0_i32_0 : i32, i32
  }
  func.func @transform_1(%arg0: i32) -> (i32, i32) {
    %c0_i32 = arith.constant 0 : i32
    %c0_i32_0 = arith.constant 0 : i32
    %c0_i32_1 = arith.constant 0 : i32
    return %c0_i32, %c0_i32_0 : i32, i32
  }
  func.func @transform_2(%arg0: i32) -> (i32, i32) {
    %c0_i32 = arith.constant 0 : i32
    %c0_i32_0 = arith.constant 0 : i32
    %c0_i32_1 = arith.constant 0 : i32
    return %c0_i32, %c0_i32_0 : i32, i32
  }
}

</mosaic_0001>

<llo_original>
// kernel: tpu_custom_call.1
$region0: #{tpu_custom_call.1}
  #allocation0 [shape = 'u32[]', space=smem, size = 0x4, offset = 0x4, fixed_abs, tag = 'smem constant byte address 0x4 - core index']
  #allocation1 [shape = 'u32[72,128]{1,0:T(1,128)}', space=vmem, size = 0x9000, scoped, tag = 'internal scratch']
  %s0 = inlined_call_operand.hbm [shape: f32[8,16], index: 0, kind: input, shape index: {}]
  %s1 = inlined_call_operand.hbm [shape: f32[120,128], index: 1, kind: input, shape index: {}]
  %s2 = inlined_call_operand.hbm [shape: f32[1,16], index: 2, kind: output, shape index: {}]
  %s3 = sld [smem:[#allocation0]]
  $region26: #{tpu_custom_call.1} parent=0
    _
  %s5 = ssub.s32 1, %s3
  %s6 = scalar_select 0, %s5, %s3
  $region1: #{tpu_custom_call.1} parent=0
    #allocation2 [shape = 'u8[4096]{0}', space=vmem, size = 0x1000, scoped, tag = 'input window, operand 0, single buffered']
    #allocation3 [shape = 's32[1]{0}', space=sflag, size = 0x4, scoped, tag = 'scoped memory for tpu_custom_call.1']
    #allocation4 [shape = 's32[1]{0}', space=sflag, size = 0x4, scoped, tag = 'scoped memory for tpu_custom_call.1']
    #allocation5 [shape = 'u8[61440]{0}', space=vmem, size = 0xf000, scoped, tag = 'input window, operand 1, single buffered']
    #allocation6 [shape = 's32[1]{0}', space=sflag, size = 0x4, scoped, tag = 'scoped memory for tpu_custom_call.1']
    #allocation7 [shape = 'u8[512]{0}', space=vmem, size = 0x400, scoped, tag = 'output window, operand 0, single buffered']
    %7 = vsyncpa [#allocation3], 0
    %8 = vsyncpa [#allocation6], 0
    %9 = vsyncpa [#allocation4], 0
    // Predicated region
    $region2: #{tpu_custom_call.1} parent=1 // pred_check
      _
    $region3: #{tpu_custom_call.1} parent=1 // pred_check_branch
      %11 = sbr.rel (0) target = $region5
    $region4: #{tpu_custom_call.1} parent=1 // pred_region
      %13 = vsyncadd [#allocation3], 0
      %s15 = sshll.u32 %s0, 4
      %s16 = int_to_ptr.hbm [resolvable:$true] %s15
      %s17 = sshll.u32 [#allocation2], 4
      %s18 = int_to_ptr.vmem [resolvable:$true] %s17
      %20 = dma.hbm_to_vmem [thread:$0]  %s16, 128, %s18, [#allocation3]
    $region5: #{tpu_custom_call.1} parent=1 // pred_fallthru
      _
    // Predicated region
    $region6: #{tpu_custom_call.1} parent=1 // pred_check
      _
    $region7: #{tpu_custom_call.1} parent=1 // pred_check_branch
      %22 = sbr.rel (0) target = $region9
    $region8: #{tpu_custom_call.1} parent=1 // pred_region
      %24 = vsyncadd [#allocation6], 0
      %s25 = sshll.u32 %s1, 4
      %s26 = int_to_ptr.hbm [resolvable:$true] %s25
      %s27 = sshll.u32 [#allocation5], 4
      %s28 = int_to_ptr.vmem [resolvable:$true] %s27
      %33 = dma.hbm_to_vmem [thread:$0]  %s26, 1920, %s28, [#allocation6], 128, 128, 8
    $region9: #{tpu_custom_call.1} parent=1 // pred_fallthru
      _
    // Predicated region
    $region10: #{tpu_custom_call.1} parent=1 // pred_check
      _
    $region11: #{tpu_custom_call.1} parent=1 // pred_check_branch
      %35 = sbr.rel (0) target = $region13
    $region12: #{tpu_custom_call.1} parent=1 // pred_region
      %37 = dma.done [#allocation3], 128
    $region13: #{tpu_custom_call.1} parent=1 // pred_fallthru
      _
    // Predicated region
    $region14: #{tpu_custom_call.1} parent=1 // pred_check
      _
    $region15: #{tpu_custom_call.1} parent=1 // pred_check_branch
      %39 = sbr.rel (0) target = $region17
    $region16: #{tpu_custom_call.1} parent=1 // pred_region
      %41 = dma.done [#allocation6], 1920
    $region17: #{tpu_custom_call.1} parent=1 // pred_fallthru
      _
    %v42 = vld [vmem:[#allocation5] sm:$0xff]
    %v43 = vld [vmem:[#allocation5 + $0x8] sm:$0xff]
    %v44 = vld [vmem:[#allocation5 + $0x10] sm:$0xff]
    %v45 = vld [vmem:[#allocation5 + $0x18] sm:$0xff]
    %v46 = vld [vmem:[#allocation5 + $0x20] sm:$0x1]
    %v47 = vld [vmem:[#allocation5 + $0x28] sm:$0xff]
    %v48 = vld [vmem:[#allocation5 + $0x30] sm:$0xff]
    %v49 = vld [vmem:[#allocation5 + $0x38] sm:$0xff]
    %v50 = vld [vmem:[#allocation5 + $0x40] sm:$0xff]
    %v51 = vld [vmem:[#allocation5 + $0x48] sm:$0x1]
    %v52 = vld [vmem:[#allocation5 + $0x50] sm:$0xff]
    %v53 = vld [vmem:[#allocation5 + $0x58] sm:$0xff]
    %v54 = vld [vmem:[#allocation5 + $0x60] sm:$0xff]
    %v55 = vld [vmem:[#allocation5 + $0x68] sm:$0xff]
    %v56 = vld [vmem:[#allocation5 + $0x70] sm:$0x1]
    %v57 = vld [vmem:[#allocation2] sm:$0xff]
    %v58 = vperm.slane %v46, 0
    %vm59 = vcmask 130048
    %v61 = vsel %vm59, %v57, 0
    %63 = vmatpush.msra.mxu0 0.0
    %64 = vmatpush.msra.mxu0 0.0
    %65 = vmatpush.msra.mxu0 0.0
    %66 = vmatpush.msra.mxu0 0.0
    %67 = vmatpush.msra.mxu0 0.0
    %68 = vmatpush.msra.mxu0 0.0
    %69 = vmatpush.msra.mxu0 0.0
    %70 = vmatpush.msra.mxu0 0.0
    %71 = vmatpush.msra.mxu0 0.0
    %72 = vmatpush.msra.mxu0 0.0
    %73 = vmatpush.msra.mxu0 0.0
    %74 = vmatpush.msra.mxu0 0.0
    %75 = vmatpush.msra.mxu0 0.0
    %76 = vmatpush.msra.mxu0 0.0
    %77 = vmatpush.msra.mxu0 %v43
    %78 = vmatpush.msra.mxu0 %v42
    %79 = vmatmul.f32.gmra.mxu0 %v61
    %v80 = vpop.f32.mrf.mxu0
    %v81 = vadd.f32 %v58, %v80
    %82 = vdwg.mxu0
    %v84 = vsel %vm59, 0.0, 0
    %86 = vmatpush.msra.mxu0 0.0
    %87 = vmatpush.msra.mxu0 0.0
    %88 = vmatpush.msra.mxu0 0.0
    %89 = vmatpush.msra.mxu0 0.0
    %90 = vmatpush.msra.mxu0 0.0
    %91 = vmatpush.msra.mxu0 0.0
    %92 = vmatpush.msra.mxu0 0.0
    %93 = vmatpush.msra.mxu0 0.0
    %94 = vmatpush.msra.mxu0 0.0
    %95 = vmatpush.msra.mxu0 0.0
    %96 = vmatpush.msra.mxu0 0.0
    %97 = vmatpush.msra.mxu0 0.0
    %98 = vmatpush.msra.mxu0 0.0
    %99 = vmatpush.msra.mxu0 0.0
    %100 = vmatpush.msra.mxu0 %v45
    %101 = vmatpush.msra.mxu0 %v44
    %102 = vmatmul.f32.gmra.mxu0 %v84
    %v103 = vpop.f32.mrf.mxu0
    %v104 = vadd.f32 0.0, %v103
    %105 = vdwg.mxu0
    %v106 = vadd.f32 %v81, %v104
    %v107 = vtanh.pop %v106
    %vm108 = vcmask 261120
    %v110 = vsel %vm108, %v107, 0
    %112 = vmatpush.msra.mxu0 0.0
    %113 = vmatpush.msra.mxu0 0.0
    %114 = vmatpush.msra.mxu0 0.0
    %115 = vmatpush.msra.mxu0 0.0
    %116 = vmatpush.msra.mxu0 0.0
    %117 = vmatpush.msra.mxu0 0.0
    %118 = vmatpush.msra.mxu0 0.0
    %119 = vmatpush.msra.mxu0 0.0
    %120 = vmatpush.msra.mxu0 0.0
    %121 = vmatpush.msra.mxu0 0.0
    %122 = vmatpush.msra.mxu0 0.0
    %123 = vmatpush.msra.mxu0 0.0
    %124 = vmatpush.msra.mxu0 %v50
    %125 = vmatpush.msra.mxu0 %v49
    %126 = vmatpush.msra.mxu0 %v48
    %127 = vmatpush.msra.mxu0 %v47
    %128 = vmatmul.f32.gmra.mxu0 %v110
    %v129 = vpop.f32.mrf.mxu0
    %v130 = vadd.f32 %v51, %v129
    %131 = vdwg.mxu0
    %v132 = vtanh.pop %v130
    %v134 = vsel %vm108, %v132, 0
    %136 = vmatpush.msra.mxu0 0.0
    %137 = vmatpush.msra.mxu0 0.0
    %138 = vmatpush.msra.mxu0 0.0
    %139 = vmatpush.msra.mxu0 0.0
    %140 = vmatpush.msra.mxu0 0.0
    %141 = vmatpush.msra.mxu0 0.0
    %142 = vmatpush.msra.mxu0 0.0
    %143 = vmatpush.msra.mxu0 0.0
    %144 = vmatpush.msra.mxu0 0.0
    %145 = vmatpush.msra.mxu0 0.0
    %146 = vmatpush.msra.mxu0 0.0
    %147 = vmatpush.msra.mxu0 0.0
    %148 = vmatpush.msra.mxu0 %v55
    %149 = vmatpush.msra.mxu0 %v54
    %150 = vmatpush.msra.mxu0 %v53
    %151 = vmatpush.msra.mxu0 %v52
    %152 = vmatmul.f32.gmra.mxu0 %v134
    %v153 = vpop.f32.mrf.mxu0
    %v154 = vadd.f32 %v56, %v153
    %155 = vdwg.mxu0
    %v156 = vmul.f32 %v154, 0.5
    %v157 = vtanh.pop %v156
    %v158 = vmul.f32 %v157, 0.5
    %v159 = vadd.f32 %v158, 0.5
    %v161 = vsel %vm59, %v159, 0
    %163 = vmatpush.msra.mxu0 0.0
    %164 = vmatpush.msra.mxu0 0.0
    %165 = vmatpush.msra.mxu0 0.0
    %166 = vmatpush.msra.mxu0 0.0
    %167 = vmatpush.msra.mxu0 0.0
    %168 = vmatpush.msra.mxu0 0.0
    %169 = vmatpush.msra.mxu0 0.0
    %170 = vmatpush.msra.mxu0 0.0
    %171 = vmatpush.msra.mxu0 0.0
    %172 = vmatpush.msra.mxu0 0.0
    %173 = vmatpush.msra.mxu0 0.0
    %174 = vmatpush.msra.mxu0 0.0
    %175 = vmatpush.msra.mxu0 0.0
    %176 = vmatpush.msra.mxu0 0.0
    %177 = vmatpush.msra.mxu0 %v45
    %178 = vmatpush.msra.mxu0 %v44
    %179 = vmatmul.f32.gmra.mxu0 %v161
    %v180 = vpop.f32.mrf.mxu0
    %v181 = vadd.f32 0.0, %v180
    %182 = vdwg.mxu0
    %v184 = vrot.slane %v181, 7
    %v186 = vadd.f32 %v81, %v184
    %v187 = vtanh.pop %v186
    %v189 = vrot.slane %v187, 1
    %v190 = vsel %vm108, %v189, 0
    %192 = vmatpush.msra.mxu0 0.0
    %193 = vmatpush.msra.mxu0 0.0
    %194 = vmatpush.msra.mxu0 0.0
    %195 = vmatpush.msra.mxu0 0.0
    %196 = vmatpush.msra.mxu0 0.0
    %197 = vmatpush.msra.mxu0 0.0
    %198 = vmatpush.msra.mxu0 0.0
    %199 = vmatpush.msra.mxu0 0.0
    %200 = vmatpush.msra.mxu0 0.0
    %201 = vmatpush.msra.mxu0 0.0
    %202 = vmatpush.msra.mxu0 0.0
    %203 = vmatpush.msra.mxu0 0.0
    %204 = vmatpush.msra.mxu0 %v50
    %205 = vmatpush.msra.mxu0 %v49
    %206 = vmatpush.msra.mxu0 %v48
    %207 = vmatpush.msra.mxu0 %v47
    %208 = vmatmul.f32.gmra.mxu0 %v190
    %v209 = vpop.f32.mrf.mxu0
    %v210 = vadd.f32 %v51, %v209
    %211 = vdwg.mxu0
    %v212 = vtanh.pop %v210
    %v214 = vsel %vm108, %v212, 0
    %216 = vmatpush.msra.mxu0 0.0
    %217 = vmatpush.msra.mxu0 0.0
    %218 = vmatpush.msra.mxu0 0.0
    %219 = vmatpush.msra.mxu0 0.0
    %220 = vmatpush.msra.mxu0 0.0
    %221 = vmatpush.msra.mxu0 0.0
    %222 = vmatpush.msra.mxu0 0.0
    %223 = vmatpush.msra.mxu0 0.0
    %224 = vmatpush.msra.mxu0 0.0
    %225 = vmatpush.msra.mxu0 0.0
    %226 = vmatpush.msra.mxu0 0.0
    %227 = vmatpush.msra.mxu0 0.0
    %228 = vmatpush.msra.mxu0 %v55
    %229 = vmatpush.msra.mxu0 %v54
    %230 = vmatpush.msra.mxu0 %v53
    %231 = vmatpush.msra.mxu0 %v52
    %232 = vmatmul.f32.gmra.mxu0 %v214
    %v233 = vpop.f32.mrf.mxu0
    %v234 = vadd.f32 %v56, %v233
    %235 = vdwg.mxu0
    %v236 = vmul.f32 %v234, 0.5
    %v237 = vtanh.pop %v236
    %v238 = vmul.f32 %v237, 0.5
    %v239 = vadd.f32 %v238, 0.5
    %v241 = vsel %vm59, %v239, 0
    %243 = vmatpush.msra.mxu0 0.0
    %244 = vmatpush.msra.mxu0 0.0
    %245 = vmatpush.msra.mxu0 0.0
    %246 = vmatpush.msra.mxu0 0.0
    %247 = vmatpush.msra.mxu0 0.0
    %248 = vmatpush.msra.mxu0 0.0
    %249 = vmatpush.msra.mxu0 0.0
    %250 = vmatpush.msra.mxu0 0.0
    %251 = vmatpush.msra.mxu0 0.0
    %252 = vmatpush.msra.mxu0 0.0
    %253 = vmatpush.msra.mxu0 0.0
    %254 = vmatpush.msra.mxu0 0.0
    %255 = vmatpush.msra.mxu0 0.0
    %256 = vmatpush.msra.mxu0 0.0
    %257 = vmatpush.msra.mxu0 %v45
    %258 = vmatpush.msra.mxu0 %v44
    %259 = vmatmul.f32.gmra.mxu0 %v241
    %v260 = vpop.f32.mrf.mxu0
    %v261 = vadd.f32 0.0, %v260
    %262 = vdwg.mxu0
    %v264 = vrot.slane %v261, 6
    %v266 = vadd.f32 %v81, %v264
    %v267 = vtanh.pop %v266
    %v269 = vrot.slane %v267, 2
    %v270 = vsel %vm108, %v269, 0
    %272 = vmatpush.msra.mxu0 0.0
    %273 = vmatpush.msra.mxu0 0.0
    %274 = vmatpush.msra.mxu0 0.0
    %275 = vmatpush.msra.mxu0 0.0
    %276 = vmatpush.msra.mxu0 0.0
    %277 = vmatpush.msra.mxu0 0.0
    %278 = vmatpush.msra.mxu0 0.0
    %279 = vmatpush.msra.mxu0 0.0
    %280 = vmatpush.msra.mxu0 0.0
    %281 = vmatpush.msra.mxu0 0.0
    %282 = vmatpush.msra.mxu0 0.0
    %283 = vmatpush.msra.mxu0 0.0
    %284 = vmatpush.msra.mxu0 %v50
    %285 = vmatpush.msra.mxu0 %v49
    %286 = vmatpush.msra.mxu0 %v48
    %287 = vmatpush.msra.mxu0 %v47
    %288 = vmatmul.f32.gmra.mxu0 %v270
    %v289 = vpop.f32.mrf.mxu0
    %v290 = vadd.f32 %v51, %v289
    %291 = vdwg.mxu0
    %v292 = vtanh.pop %v290
    %v294 = vsel %vm108, %v292, 0
    %296 = vmatpush.msra.mxu0 0.0
    %297 = vmatpush.msra.mxu0 0.0
    %298 = vmatpush.msra.mxu0 0.0
    %299 = vmatpush.msra.mxu0 0.0
    %300 = vmatpush.msra.mxu0 0.0
    %301 = vmatpush.msra.mxu0 0.0
    %302 = vmatpush.msra.mxu0 0.0
    %303 = vmatpush.msra.mxu0 0.0
    %304 = vmatpush.msra.mxu0 0.0
    %305 = vmatpush.msra.mxu0 0.0
    %306 = vmatpush.msra.mxu0 0.0
    %307 = vmatpush.msra.mxu0 0.0
    %308 = vmatpush.msra.mxu0 %v55
    %309 = vmatpush.msra.mxu0 %v54
    %310 = vmatpush.msra.mxu0 %v53
    %311 = vmatpush.msra.mxu0 %v52
    %312 = vmatmul.f32.gmra.mxu0 %v294
    %v313 = vpop.f32.mrf.mxu0
    %v314 = vadd.f32 %v56, %v313
    %315 = vdwg.mxu0
    %v316 = vmul.f32 %v314, 0.5
    %v317 = vtanh.pop %v316
    %v318 = vmul.f32 %v317, 0.5
    %v319 = vadd.f32 %v318, 0.5
    %v321 = vsel %vm59, %v319, 0
    %323 = vmatpush.msra.mxu0 0.0
    %324 = vmatpush.msra.mxu0 0.0
    %325 = vmatpush.msra.mxu0 0.0
    %326 = vmatpush.msra.mxu0 0.0
    %327 = vmatpush.msra.mxu0 0.0
    %328 = vmatpush.msra.mxu0 0.0
    %329 = vmatpush.msra.mxu0 0.0
    %330 = vmatpush.msra.mxu0 0.0
    %331 = vmatpush.msra.mxu0 0.0
    %332 = vmatpush.msra.mxu0 0.0
    %333 = vmatpush.msra.mxu0 0.0
    %334 = vmatpush.msra.mxu0 0.0
    %335 = vmatpush.msra.mxu0 0.0
    %336 = vmatpush.msra.mxu0 0.0
    %337 = vmatpush.msra.mxu0 %v45
    %338 = vmatpush.msra.mxu0 %v44
    %339 = vmatmul.f32.gmra.mxu0 %v321
    %v340 = vpop.f32.mrf.mxu0
    %v341 = vadd.f32 0.0, %v340
    %342 = vdwg.mxu0
    %v344 = vrot.slane %v341, 5
    %v346 = vadd.f32 %v81, %v344
    %v347 = vtanh.pop %v346
    %v349 = vrot.slane %v347, 3
    %v350 = vsel %vm108, %v349, 0
    %352 = vmatpush.msra.mxu0 0.0
    %353 = vmatpush.msra.mxu0 0.0
    %354 = vmatpush.msra.mxu0 0.0
    %355 = vmatpush.msra.mxu0 0.0
    %356 = vmatpush.msra.mxu0 0.0
    %357 = vmatpush.msra.mxu0 0.0
    %358 = vmatpush.msra.mxu0 0.0
    %359 = vmatpush.msra.mxu0 0.0
    %360 = vmatpush.msra.mxu0 0.0
    %361 = vmatpush.msra.mxu0 0.0
    %362 = vmatpush.msra.mxu0 0.0
    %363 = vmatpush.msra.mxu0 0.0
    %364 = vmatpush.msra.mxu0 %v50
    %365 = vmatpush.msra.mxu0 %v49
    %366 = vmatpush.msra.mxu0 %v48
    %367 = vmatpush.msra.mxu0 %v47
    %368 = vmatmul.f32.gmra.mxu0 %v350
    %v369 = vpop.f32.mrf.mxu0
    %v370 = vadd.f32 %v51, %v369
    %371 = vdwg.mxu0
    %v372 = vtanh.pop %v370
    %v374 = vsel %vm108, %v372, 0
    %376 = vmatpush.msra.mxu0 0.0
    %377 = vmatpush.msra.mxu0 0.0
    %378 = vmatpush.msra.mxu0 0.0
    %379 = vmatpush.msra.mxu0 0.0
    %380 = vmatpush.msra.mxu0 0.0
    %381 = vmatpush.msra.mxu0 0.0
    %382 = vmatpush.msra.mxu0 0.0
    %383 = vmatpush.msra.mxu0 0.0
    %384 = vmatpush.msra.mxu0 0.0
    %385 = vmatpush.msra.mxu0 0.0
    %386 = vmatpush.msra.mxu0 0.0
    %387 = vmatpush.msra.mxu0 0.0
    %388 = vmatpush.msra.mxu0 %v55
    %389 = vmatpush.msra.mxu0 %v54
    %390 = vmatpush.msra.mxu0 %v53
    %391 = vmatpush.msra.mxu0 %v52
    %392 = vmatmul.f32.gmra.mxu0 %v374
    %v393 = vpop.f32.mrf.mxu0
    %v394 = vadd.f32 %v56, %v393
    %395 = vdwg.mxu0
    %v396 = vmul.f32 %v394, 0.5
    %v397 = vtanh.pop %v396
    %v398 = vmul.f32 %v397, 0.5
    %v399 = vadd.f32 %v398, 0.5
    %v401 = vsel %vm59, %v399, 0
    %403 = vmatpush.msra.mxu0 0.0
    %404 = vmatpush.msra.mxu0 0.0
    %405 = vmatpush.msra.mxu0 0.0
    %406 = vmatpush.msra.mxu0 0.0
    %407 = vmatpush.msra.mxu0 0.0
    %408 = vmatpush.msra.mxu0 0.0
    %409 = vmatpush.msra.mxu0 0.0
    %410 = vmatpush.msra.mxu0 0.0
    %411 = vmatpush.msra.mxu0 0.0
    %412 = vmatpush.msra.mxu0 0.0
    %413 = vmatpush.msra.mxu0 0.0
    %414 = vmatpush.msra.mxu0 0.0
    %415 = vmatpush.msra.mxu0 0.0
    %416 = vmatpush.msra.mxu0 0.0
    %417 = vmatpush.msra.mxu0 %v45
    %418 = vmatpush.msra.mxu0 %v44
    %419 = vmatmul.f32.gmra.mxu0 %v401
    %v420 = vpop.f32.mrf.mxu0
    %v421 = vadd.f32 0.0, %v420
    %422 = vdwg.mxu0
    %v424 = vrot.slane %v421, 4
    %v426 = vadd.f32 %v81, %v424
    %v427 = vtanh.pop %v426
    %v429 = vrot.slane %v427, 4
    %v430 = vsel %vm108, %v429, 0
    %432 = vmatpush.msra.mxu0 0.0
    %433 = vmatpush.msra.mxu0 0.0
    %434 = vmatpush.msra.mxu0 0.0
    %435 = vmatpush.msra.mxu0 0.0
    %436 = vmatpush.msra.mxu0 0.0
    %437 = vmatpush.msra.mxu0 0.0
    %438 = vmatpush.msra.mxu0 0.0
    %439 = vmatpush.msra.mxu0 0.0
    %440 = vmatpush.msra.mxu0 0.0
    %441 = vmatpush.msra.mxu0 0.0
    %442 = vmatpush.msra.mxu0 0.0
    %443 = vmatpush.msra.mxu0 0.0
    %444 = vmatpush.msra.mxu0 %v50
    %445 = vmatpush.msra.mxu0 %v49
    %446 = vmatpush.msra.mxu0 %v48
    %447 = vmatpush.msra.mxu0 %v47
    %448 = vmatmul.f32.gmra.mxu0 %v430
    %v449 = vpop.f32.mrf.mxu0
    %v450 = vadd.f32 %v51, %v449
    %451 = vdwg.mxu0
    %v452 = vtanh.pop %v450
    %v454 = vsel %vm108, %v452, 0
    %456 = vmatpush.msra.mxu0 0.0
    %457 = vmatpush.msra.mxu0 0.0
    %458 = vmatpush.msra.mxu0 0.0
    %459 = vmatpush.msra.mxu0 0.0
    %460 = vmatpush.msra.mxu0 0.0
    %461 = vmatpush.msra.mxu0 0.0
    %462 = vmatpush.msra.mxu0 0.0
    %463 = vmatpush.msra.mxu0 0.0
    %464 = vmatpush.msra.mxu0 0.0
    %465 = vmatpush.msra.mxu0 0.0
    %466 = vmatpush.msra.mxu0 0.0
    %467 = vmatpush.msra.mxu0 0.0
    %468 = vmatpush.msra.mxu0 %v55
    %469 = vmatpush.msra.mxu0 %v54
    %470 = vmatpush.msra.mxu0 %v53
    %471 = vmatpush.msra.mxu0 %v52
    %472 = vmatmul.f32.gmra.mxu0 %v454
    %v473 = vpop.f32.mrf.mxu0
    %v474 = vadd.f32 %v56, %v473
    %475 = vdwg.mxu0
    %v476 = vmul.f32 %v474, 0.5
    %v477 = vtanh.pop %v476
    %v478 = vmul.f32 %v477, 0.5
    %v479 = vadd.f32 %v478, 0.5
    %v481 = vsel %vm59, %v479, 0
    %483 = vmatpush.msra.mxu0 0.0
    %484 = vmatpush.msra.mxu0 0.0
    %485 = vmatpush.msra.mxu0 0.0
    %486 = vmatpush.msra.mxu0 0.0
    %487 = vmatpush.msra.mxu0 0.0
    %488 = vmatpush.msra.mxu0 0.0
    %489 = vmatpush.msra.mxu0 0.0
    %490 = vmatpush.msra.mxu0 0.0
    %491 = vmatpush.msra.mxu0 0.0
    %492 = vmatpush.msra.mxu0 0.0
    %493 = vmatpush.msra.mxu0 0.0
    %494 = vmatpush.msra.mxu0 0.0
    %495 = vmatpush.msra.mxu0 0.0
    %496 = vmatpush.msra.mxu0 0.0
    %497 = vmatpush.msra.mxu0 %v45
    %498 = vmatpush.msra.mxu0 %v44
    %499 = vmatmul.f32.gmra.mxu0 %v481
    %v500 = vpop.f32.mrf.mxu0
    %v501 = vadd.f32 0.0, %v500
    %502 = vdwg.mxu0
    %v504 = vrot.slane %v501, 3
    %v506 = vadd.f32 %v81, %v504
    %v507 = vtanh.pop %v506
    %v509 = vrot.slane %v507, 5
    %v510 = vsel %vm108, %v509, 0
    %512 = vmatpush.msra.mxu0 0.0
    %513 = vmatpush.msra.mxu0 0.0
    %514 = vmatpush.msra.mxu0 0.0
    %515 = vmatpush.msra.mxu0 0.0
    %516 = vmatpush.msra.mxu0 0.0
    %517 = vmatpush.msra.mxu0 0.0
    %518 = vmatpush.msra.mxu0 0.0
    %519 = vmatpush.msra.mxu0 0.0
    %520 = vmatpush.msra.mxu0 0.0
    %521 = vmatpush.msra.mxu0 0.0
    %522 = vmatpush.msra.mxu0 0.0
    %523 = vmatpush.msra.mxu0 0.0
    %524 = vmatpush.msra.mxu0 %v50
    %525 = vmatpush.msra.mxu0 %v49
    %526 = vmatpush.msra.mxu0 %v48
    %527 = vmatpush.msra.mxu0 %v47
    %528 = vmatmul.f32.gmra.mxu0 %v510
    %v529 = vpop.f32.mrf.mxu0
    %v530 = vadd.f32 %v51, %v529
    %531 = vdwg.mxu0
    %v532 = vtanh.pop %v530
    %v534 = vsel %vm108, %v532, 0
    %536 = vmatpush.msra.mxu0 0.0
    %537 = vmatpush.msra.mxu0 0.0
    %538 = vmatpush.msra.mxu0 0.0
    %539 = vmatpush.msra.mxu0 0.0
    %540 = vmatpush.msra.mxu0 0.0
    %541 = vmatpush.msra.mxu0 0.0
    %542 = vmatpush.msra.mxu0 0.0
    %543 = vmatpush.msra.mxu0 0.0
    %544 = vmatpush.msra.mxu0 0.0
    %545 = vmatpush.msra.mxu0 0.0
    %546 = vmatpush.msra.mxu0 0.0
    %547 = vmatpush.msra.mxu0 0.0
    %548 = vmatpush.msra.mxu0 %v55
    %549 = vmatpush.msra.mxu0 %v54
    %550 = vmatpush.msra.mxu0 %v53
    %551 = vmatpush.msra.mxu0 %v52
    %552 = vmatmul.f32.gmra.mxu0 %v534
    %v553 = vpop.f32.mrf.mxu0
    %v554 = vadd.f32 %v56, %v553
    %555 = vdwg.mxu0
    %v556 = vmul.f32 %v554, 0.5
    %v557 = vtanh.pop %v556
    %v558 = vmul.f32 %v557, 0.5
    %v559 = vadd.f32 %v558, 0.5
    %v561 = vsel %vm59, %v559, 0
    %563 = vmatpush.msra.mxu0 0.0
    %564 = vmatpush.msra.mxu0 0.0
    %565 = vmatpush.msra.mxu0 0.0
    %566 = vmatpush.msra.mxu0 0.0
    %567 = vmatpush.msra.mxu0 0.0
    %568 = vmatpush.msra.mxu0 0.0
    %569 = vmatpush.msra.mxu0 0.0
    %570 = vmatpush.msra.mxu0 0.0
    %571 = vmatpush.msra.mxu0 0.0
    %572 = vmatpush.msra.mxu0 0.0
    %573 = vmatpush.msra.mxu0 0.0
    %574 = vmatpush.msra.mxu0 0.0
    %575 = vmatpush.msra.mxu0 0.0
    %576 = vmatpush.msra.mxu0 0.0
    %577 = vmatpush.msra.mxu0 %v45
    %578 = vmatpush.msra.mxu0 %v44
    %579 = vmatmul.f32.gmra.mxu0 %v561
    %v580 = vpop.f32.mrf.mxu0
    %v581 = vadd.f32 0.0, %v580
    %582 = vdwg.mxu0
    %v584 = vrot.slane %v581, 2
    %v586 = vadd.f32 %v81, %v584
    %v587 = vtanh.pop %v586
    %v589 = vrot.slane %v587, 6
    %v590 = vsel %vm108, %v589, 0
    %592 = vmatpush.msra.mxu0 0.0
    %593 = vmatpush.msra.mxu0 0.0
    %594 = vmatpush.msra.mxu0 0.0
    %595 = vmatpush.msra.mxu0 0.0
    %596 = vmatpush.msra.mxu0 0.0
    %597 = vmatpush.msra.mxu0 0.0
    %598 = vmatpush.msra.mxu0 0.0
    %599 = vmatpush.msra.mxu0 0.0
    %600 = vmatpush.msra.mxu0 0.0
    %601 = vmatpush.msra.mxu0 0.0
    %602 = vmatpush.msra.mxu0 0.0
    %603 = vmatpush.msra.mxu0 0.0
    %604 = vmatpush.msra.mxu0 %v50
    %605 = vmatpush.msra.mxu0 %v49
    %606 = vmatpush.msra.mxu0 %v48
    %607 = vmatpush.msra.mxu0 %v47
    %608 = vmatmul.f32.gmra.mxu0 %v590
    %v609 = vpop.f32.mrf.mxu0
    %v610 = vadd.f32 %v51, %v609
    %611 = vdwg.mxu0
    %v612 = vtanh.pop %v610
    %v614 = vsel %vm108, %v612, 0
    %616 = vmatpush.msra.mxu0 0.0
    %617 = vmatpush.msra.mxu0 0.0
    %618 = vmatpush.msra.mxu0 0.0
    %619 = vmatpush.msra.mxu0 0.0
    %620 = vmatpush.msra.mxu0 0.0
    %621 = vmatpush.msra.mxu0 0.0
    %622 = vmatpush.msra.mxu0 0.0
    %623 = vmatpush.msra.mxu0 0.0
    %624 = vmatpush.msra.mxu0 0.0
    %625 = vmatpush.msra.mxu0 0.0
    %626 = vmatpush.msra.mxu0 0.0
    %627 = vmatpush.msra.mxu0 0.0
    %628 = vmatpush.msra.mxu0 %v55
    %629 = vmatpush.msra.mxu0 %v54
    %630 = vmatpush.msra.mxu0 %v53
    %631 = vmatpush.msra.mxu0 %v52
    %632 = vmatmul.f32.gmra.mxu0 %v614
    %v633 = vpop.f32.mrf.mxu0
    %v634 = vadd.f32 %v56, %v633
    %635 = vdwg.mxu0
    %v636 = vmul.f32 %v634, 0.5
    %v637 = vtanh.pop %v636
    %v638 = vmul.f32 %v637, 0.5
    %v639 = vadd.f32 %v638, 0.5
    %v641 = vsel %vm59, %v639, 0
    %643 = vmatpush.msra.mxu0 0.0
    %644 = vmatpush.msra.mxu0 0.0
    %645 = vmatpush.msra.mxu0 0.0
    %646 = vmatpush.msra.mxu0 0.0
    %647 = vmatpush.msra.mxu0 0.0
    %648 = vmatpush.msra.mxu0 0.0
    %649 = vmatpush.msra.mxu0 0.0
    %650 = vmatpush.msra.mxu0 0.0
    %651 = vmatpush.msra.mxu0 0.0
    %652 = vmatpush.msra.mxu0 0.0
    %653 = vmatpush.msra.mxu0 0.0
    %654 = vmatpush.msra.mxu0 0.0
    %655 = vmatpush.msra.mxu0 0.0
    %656 = vmatpush.msra.mxu0 0.0
    %657 = vmatpush.msra.mxu0 %v45
    %658 = vmatpush.msra.mxu0 %v44
    %659 = vmatmul.f32.gmra.mxu0 %v641
    %v660 = vpop.f32.mrf.mxu0
    %v661 = vadd.f32 0.0, %v660
    %662 = vdwg.mxu0
    %v664 = vrot.slane %v661, 1
    %v666 = vadd.f32 %v81, %v664
    %v667 = vtanh.pop %v666
    %v669 = vrot.slane %v667, 7
    %v670 = vsel %vm108, %v669, 0
    %672 = vmatpush.msra.mxu0 0.0
    %673 = vmatpush.msra.mxu0 0.0
    %674 = vmatpush.msra.mxu0 0.0
    %675 = vmatpush.msra.mxu0 0.0
    %676 = vmatpush.msra.mxu0 0.0
    %677 = vmatpush.msra.mxu0 0.0
    %678 = vmatpush.msra.mxu0 0.0
    %679 = vmatpush.msra.mxu0 0.0
    %680 = vmatpush.msra.mxu0 0.0
    %681 = vmatpush.msra.mxu0 0.0
    %682 = vmatpush.msra.mxu0 0.0
    %683 = vmatpush.msra.mxu0 0.0
    %684 = vmatpush.msra.mxu0 %v50
    %685 = vmatpush.msra.mxu0 %v49
    %686 = vmatpush.msra.mxu0 %v48
    %687 = vmatpush.msra.mxu0 %v47
    %688 = vmatmul.f32.gmra.mxu0 %v670
    %v689 = vpop.f32.mrf.mxu0
    %v690 = vadd.f32 %v51, %v689
    %691 = vdwg.mxu0
    %v692 = vtanh.pop %v690
    %v694 = vsel %vm108, %v692, 0
    %696 = vmatpush.msra.mxu0 0.0
    %697 = vmatpush.msra.mxu0 0.0
    %698 = vmatpush.msra.mxu0 0.0
    %699 = vmatpush.msra.mxu0 0.0
    %700 = vmatpush.msra.mxu0 0.0
    %701 = vmatpush.msra.mxu0 0.0
    %702 = vmatpush.msra.mxu0 0.0
    %703 = vmatpush.msra.mxu0 0.0
    %704 = vmatpush.msra.mxu0 0.0
    %705 = vmatpush.msra.mxu0 0.0
    %706 = vmatpush.msra.mxu0 0.0
    %707 = vmatpush.msra.mxu0 0.0
    %708 = vmatpush.msra.mxu0 %v55
    %709 = vmatpush.msra.mxu0 %v54
    %710 = vmatpush.msra.mxu0 %v53
    %711 = vmatpush.msra.mxu0 %v52
    %712 = vmatmul.f32.gmra.mxu0 %v694
    %v713 = vpop.f32.mrf.mxu0
    %v714 = vadd.f32 %v56, %v713
    %715 = vdwg.mxu0
    %v716 = vmul.f32 %v714, 0.5
    %v717 = vtanh.pop %v716
    %v718 = vmul.f32 %v717, 0.5
    %v719 = vadd.f32 %v718, 0.5
    %vm720 = vcmask 122880
    %721 = vst.msk [vmem:[#allocation7] sm:$0x1] %vm720, %v719
    // Predicated region
    $region18: #{tpu_custom_call.1} parent=1 // pred_check
      _
    $region19: #{tpu_custom_call.1} parent=1 // pred_check_branch
      %723 = sbr.rel (0) target = $region21
    $region20: #{tpu_custom_call.1} parent=1 // pred_region
      %725 = vsyncadd [#allocation4], 0
      %s727 = sshll.u32 [#allocation7], 4
      %s728 = int_to_ptr.vmem [resolvable:$true] %s727
      %s729 = sshll.u32 %s2, 4
      %s730 = int_to_ptr.hbm [resolvable:$true] %s729
      %732 = dma.vmem_to_hbm [thread:$0]  %s728, 16, %s730, [#allocation4]
    $region21: #{tpu_custom_call.1} parent=1 // pred_fallthru
      _
    // Predicated region
    $region22: #{tpu_custom_call.1} parent=1 // pred_check
      _
    $region23: #{tpu_custom_call.1} parent=1 // pred_check_branch
      %734 = sbr.rel (0) target = $region25
    $region24: #{tpu_custom_call.1} parent=1 // pred_region
      %736 = dma.done [#allocation4], 16
    $region25: #{tpu_custom_call.1} parent=1 // pred_fallthru
      _
    %737 = vsyncpa [#allocation3], 1
    %738 = vsyncpa [#allocation6], 1
    %739 = vsyncpa [#allocation4], 1

</llo_original>
